<compile_context>
chip_gen: v6e
topology: v6e:2x2x1
jax: 0.10.0
libtpu: 0.0.40
codegen_flags: <defaults>
</compile_context>

<pallas_src>
import functools

import jax
import jax.numpy as jnp
from jax.experimental import pallas as pl
from jax.experimental.pallas import tpu as pltpu

EPS = 1e-5
VMEM_LIMIT = 32 * 1024 * 1024
TARGET_BLOCK_BYTES = 4 << 20


# ----------------------------- kernels -----------------------------

def _bn_stats_kernel(x_ref, sum_ref, ssq_ref):
    """Accumulate per-channel sum / sum-of-squares over the (N, S) grid axes.

    sum_ref / ssq_ref are (C_blk, 1) output blocks whose index_map is constant
    along the N and S grid axes, so they stay resident in VMEM and act as
    accumulators for the whole reduction of one channel block.
    """
    n = pl.program_id(1)
    s = pl.program_id(2)

    @pl.when((n == 0) & (s == 0))
    def _():
        sum_ref[...] = jnp.zeros_like(sum_ref)
        ssq_ref[...] = jnp.zeros_like(ssq_ref)

    x = x_ref[...].astype(jnp.float32)                      # (C_blk, S_blk)
    sum_ref[...] += jnp.sum(x, axis=1, keepdims=True)       # (C_blk, 1)
    ssq_ref[...] += jnp.sum(x * x, axis=1, keepdims=True)


def _bn_apply_kernel(x_ref, scale_ref, shift_ref, o_ref):
    """y = x * scale - shift (fused_bn); scale/shift broadcast along lanes."""
    x = x_ref[...].astype(jnp.float32)                      # (C_blk, S_blk)
    o_ref[...] = (x * scale_ref[...] - shift_ref[...]).astype(o_ref.dtype)


# ----------------------------- block sizing -----------------------------

def _largest_divisor_multiple(dim, quantum, cap):
    """Largest divisor of `dim` that is a multiple of `quantum` and <= cap.

    Falls back to `dim` itself (a full-extent block is always legal)."""
    if dim % quantum != 0:
        return dim
    cap = max(quantum, min(cap, dim))
    best = dim
    d = quantum
    found = False
    while d <= cap:
        if dim % d == 0:
            best = d
            found = True
        d += quantum
    return best if found else dim


def _choose_blocks(C, S, dtype_bytes, target_bytes=TARGET_BLOCK_BYTES):
    """Pick (C_blk, S_blk) dividing (C, S) exactly, under a VMEM byte budget."""
    c_quantum = {4: 8, 2: 16, 1: 32}.get(dtype_bytes, 8)
    s_cap = max(128, target_bytes // (dtype_bytes * c_quantum))
    s_blk = _largest_divisor_multiple(S, 128, s_cap)
    c_cap = max(c_quantum, target_bytes // (dtype_bytes * s_blk))
    c_blk = _largest_divisor_multiple(C, c_quantum, c_cap)
    return c_blk, s_blk


# ----------------------------- wrapper -----------------------------

def batch_norm_2d(x_nchw, gain, bias, stored_mean=None, stored_var=None,
                  *, training=True, momentum=0.1, eps=EPS,
                  block_c=None, block_s=None):
    """Forward of the `bn` module (plain F.batch_norm path).

    Returns (y_nchw, new_running_mean, new_running_var); the running stats are
    the functional equivalent of PyTorch's in-place buffer update.
    """
    N, C, H, W = x_nchw.shape
    S = H * W
    count = N * S
    in_dtype = x_nchw.dtype
    dtype_bytes = jnp.dtype(in_dtype).itemsize

    # NCHW -> (N, C, S): free, contiguous reshape; spatial on the lane axis.
    x3 = x_nchw.reshape(N, C, S)

    c_blk, s_blk = _choose_blocks(C, S, dtype_bytes)
    if block_c is not None:
        c_blk = block_c
    if block_s is not None:
        s_blk = block_s
    assert C % c_blk == 0 and S % s_blk == 0, (C, c_blk, S, s_blk)
    c_tiles = C // c_blk
    s_tiles = S // s_blk

    x_spec = pl.BlockSpec((None, c_blk, s_blk), lambda c, n, s: (n, c, s))
    vec_spec = pl.BlockSpec((c_blk, 1), lambda c, n, s: (c, 0))

    if training:
        sums, ssqs = pl.pallas_call(
            _bn_stats_kernel,
            grid=(c_tiles, N, s_tiles),
            in_specs=[x_spec],
            out_specs=(vec_spec, vec_spec),
            out_shape=(jax.ShapeDtypeStruct((C, 1), jnp.float32),
                       jax.ShapeDtypeStruct((C, 1), jnp.float32)),
            compiler_params=pltpu.CompilerParams(
                dimension_semantics=("parallel", "arbitrary", "arbitrary"),
                vmem_limit_bytes=VMEM_LIMIT),
        )(x3)
        mean = sums[:, 0] * (1.0 / count)
        # Guard against E[x^2]-E[x]^2 cancellation going slightly negative.
        var = jnp.maximum(ssqs[:, 0] * (1.0 / count) - mean * mean, 0.0)
    else:
        mean = stored_mean.astype(jnp.float32)
        var = stored_var.astype(jnp.float32)

    # Tiny (C,) glue, fused by XLA: compute scale/shift once so the apply
    # kernel is a single fused multiply-subtract per element.
    scale = jax.lax.rsqrt(var + eps) * gain.astype(jnp.float32)
    shift = mean * scale - bias.astype(jnp.float32)

    out3 = pl.pallas_call(
        _bn_apply_kernel,
        grid=(c_tiles, N, s_tiles),
        in_specs=[x_spec, vec_spec, vec_spec],
        out_specs=x_spec,
        out_shape=jax.ShapeDtypeStruct((N, C, S), in_dtype),
        compiler_params=pltpu.CompilerParams(
            dimension_semantics=("parallel", "parallel", "parallel"),
            vmem_limit_bytes=VMEM_LIMIT),
    )(x3, scale.reshape(C, 1), shift.reshape(C, 1))

    out = out3.reshape(N, C, H, W)     # free reshape back to NCHW

    if training and stored_mean is not None and stored_var is not None:
        # Functional running-stat update (PyTorch uses unbiased variance here).
        unbiased = var * (count / max(count - 1, 1))
        new_mean = (1.0 - momentum) * stored_mean + momentum * mean
        new_var = (1.0 - momentum) * stored_var + momentum * unbiased
        return out, new_mean.astype(stored_mean.dtype), new_var.astype(stored_var.dtype)
    return out, stored_mean, stored_var


# ----------------------------- pure-JAX reference -----------------------------

def _reference_train(x, gain, bias, eps=EPS):
    m = jnp.mean(x, axis=(0, 2, 3), keepdims=True)
    v = jnp.mean(x * x, axis=(0, 2, 3), keepdims=True) - m * m
    scale = jax.lax.rsqrt(v + eps) * gain.reshape(1, -1, 1, 1)
    shift = m * scale - bias.reshape(1, -1, 1, 1)
    return x * scale - shift


def _reference_eval(x, gain, bias, mean, var, eps=EPS):
    scale = (jax.lax.rsqrt(var + eps) * gain).reshape(1, -1, 1, 1)
    shift = (mean * jax.lax.rsqrt(var + eps) * gain - bias).reshape(1, -1, 1, 1)
    return x * scale - shift


# TODO(synk): cross_replica (SyncBN2d) branch not implemented; only the default
#             F.batch_norm path (and the equivalent fused_bn eval path).

if __name__ == "__main__":
    key = jax.random.PRNGKey(0)
    N, C, H, W = 2, 4, 16, 16
    kx, kg, kb = jax.random.split(key, 3)

    x = jax.random.normal(kx, (N, C, H, W), jnp.float32) * 2.0 + 0.5
    gain = 1.0 + 0.1 * jax.random.normal(kg, (C,), jnp.float32)
    bias = 0.1 * jax.random.normal(kb, (C,), jnp.float32)
    stored_mean = jnp.zeros((C,), jnp.float32)
    stored_var = jnp.ones((C,), jnp.float32)

    ref = _reference_train(x, gain, bias)

    # Training path, forced multi-tile grid (S=256 -> 2 spatial tiles, N=2).
    fwd_train = jax.jit(functools.partial(batch_norm_2d, training=True,
                                          block_s=128))
    out, new_rm, new_rv = fwd_train(x, gain, bias, stored_mean, stored_var)
    out = jax.block_until_ready(out)
    assert out.shape == (N, C, H, W), out.shape
    err = float(jnp.max(jnp.abs(out - ref)))
    assert err < 1e-4, f"train-mode max abs error {err}"

    # Running-stat (functional) update check.
    M = N * H * W
    ref_mean = jnp.mean(x, axis=(0, 2, 3))
    ref_var = jnp.mean(x * x, axis=(0, 2, 3)) - ref_mean * ref_mean
    err_rm = float(jnp.max(jnp.abs(new_rm - 0.1 * ref_mean)))
    err_rv = float(jnp.max(jnp.abs(new_rv - (0.9 + 0.1 * ref_var * M / (M - 1)))))
    assert err_rm < 1e-3 and err_rv < 1e-3, (err_rm, err_rv)

    # Training path with the default (auto-sized) tiling as well.
    out2, _, _ = jax.jit(functools.partial(batch_norm_2d, training=True))(
        x, gain, bias, stored_mean, stored_var)
    out2 = jax.block_until_ready(out2)
    err2 = float(jnp.max(jnp.abs(out2 - ref)))
    assert err2 < 1e-4, f"auto-tile max abs error {err2}"

    # Eval path (stored running statistics).
    fwd_eval = jax.jit(functools.partial(batch_norm_2d, training=False,
                                         block_s=128))
    out_e, _, _ = fwd_eval(x, gain, bias, stored_mean, stored_var)
    out_e = jax.block_until_ready(out_e)
    ref_e = _reference_eval(x, gain, bias, stored_mean, stored_var)
    err_e = float(jnp.max(jnp.abs(out_e - ref_e)))
    assert err_e < 1e-4, f"eval-mode max abs error {err_e}"

    print("KERNEL_OK")
</pallas_src>

<mosaic_0001>
module attributes {stable_mosaic.version = 11 : i64} {
  func.func @_bn_stats_kernel(%arg0: i32, %arg1: i32, %arg2: i32, %arg3: memref<1x4x128xf32, #tpu.memory_space<vmem>>, %arg4: memref<4x1xf32, #tpu.memory_space<vmem>>, %arg5: memref<4x1xf32, #tpu.memory_space<vmem>>) attributes {dimension_semantics = [#tpu.dimension_semantics<parallel>, #tpu.dimension_semantics<arbitrary>, #tpu.dimension_semantics<arbitrary>], iteration_bounds = array<i64: 1, 2, 2>, scalar_prefetch = 0 : i64, scratch_operands = 0 : i64, tpu.core_type = #tpu.core_type<tc>, window_params = [{transform_indices = @transform_0, window_bounds = array<i64: 1, 4, 128>}, {transform_indices = @transform_1, window_bounds = array<i64: 4, 1>}, {transform_indices = @transform_2, window_bounds = array<i64: 4, 1>}]} {
    %c0_i32 = arith.constant 0 : i32
    %0 = arith.cmpi eq, %arg1, %c0_i32 : i32
    %c0_i32_0 = arith.constant 0 : i32
    %1 = arith.cmpi eq, %arg2, %c0_i32_0 : i32
    %2 = arith.andi %0, %1 : i1
    %3 = arith.extui %2 : i1 to i32
    %c0_i32_1 = arith.constant 0 : i32
    %4 = arith.cmpi ne, %3, %c0_i32_1 : i32
    scf.if %4 {
      %cst_13 = arith.constant 0.000000e+00 : f32
      %18 = vector.broadcast %cst_13 : f32 to vector<4x1xf32>
      %c0_14 = arith.constant 0 : index
      %c0_15 = arith.constant 0 : index
      %19 = vector.load %arg4[%c0_14, %c0_15] : memref<4x1xf32, #tpu.memory_space<vmem>>, vector<4x1xf32>
      tpu.vector_store %arg4[%c0_14, %c0_15], %18 {strides = array<i32>} : memref<4x1xf32, #tpu.memory_space<vmem>>, vector<4x1xf32>,
      %cst_16 = arith.constant 0.000000e+00 : f32
      %20 = vector.broadcast %cst_16 : f32 to vector<4x1xf32>
      %c0_17 = arith.constant 0 : index
      %c0_18 = arith.constant 0 : index
      %21 = vector.load %arg5[%c0_17, %c0_18] : memref<4x1xf32, #tpu.memory_space<vmem>>, vector<4x1xf32>
      tpu.vector_store %arg5[%c0_17, %c0_18], %20 {strides = array<i32>} : memref<4x1xf32, #tpu.memory_space<vmem>>, vector<4x1xf32>,
    } else {
    }
    %c0 = arith.constant 0 : index
    %c0_2 = arith.constant 0 : index
    %c0_3 = arith.constant 0 : index
    %5 = vector.load %arg3[%c0, %c0_2, %c0_3] : memref<1x4x128xf32, #tpu.memory_space<vmem>>, vector<1x4x128xf32>
    %6 = vector.shape_cast %5 : vector<1x4x128xf32> to vector<4x128xf32>
    %c0_4 = arith.constant 0 : index
    %c0_5 = arith.constant 0 : index
    %7 = vector.load %arg4[%c0_4, %c0_5] : memref<4x1xf32, #tpu.memory_space<vmem>>, vector<4x1xf32>
    %cst = arith.constant dense<0.000000e+00> : vector<4xf32>
    %8 = vector.multi_reduction <add>, %6, %cst [1] : vector<4x128xf32> to vector<4xf32>
    %9 = vector.shape_cast %8 : vector<4xf32> to vector<4x1xf32>
    %10 = arith.addf %7, %9 : vector<4x1xf32>
    %c0_6 = arith.constant 0 : index
    %c0_7 = arith.constant 0 : index
    %11 = vector.load %arg4[%c0_6, %c0_7] : memref<4x1xf32, #tpu.memory_space<vmem>>, vector<4x1xf32>
    tpu.vector_store %arg4[%c0_6, %c0_7], %10 {strides = array<i32>} : memref<4x1xf32, #tpu.memory_space<vmem>>, vector<4x1xf32>,
    %c0_8 = arith.constant 0 : index
    %c0_9 = arith.constant 0 : index
    %12 = vector.load %arg5[%c0_8, %c0_9] : memref<4x1xf32, #tpu.memory_space<vmem>>, vector<4x1xf32>
    %13 = arith.mulf %6, %6 : vector<4x128xf32>
    %cst_10 = arith.constant dense<0.000000e+00> : vector<4xf32>
    %14 = vector.multi_reduction <add>, %13, %cst_10 [1] : vector<4x128xf32> to vector<4xf32>
    %15 = vector.shape_cast %14 : vector<4xf32> to vector<4x1xf32>
    %16 = arith.addf %12, %15 : vector<4x1xf32>
    %c0_11 = arith.constant 0 : index
    %c0_12 = arith.constant 0 : index
    %17 = vector.load %arg5[%c0_11, %c0_12] : memref<4x1xf32, #tpu.memory_space<vmem>>, vector<4x1xf32>
    tpu.vector_store %arg5[%c0_11, %c0_12], %16 {strides = array<i32>} : memref<4x1xf32, #tpu.memory_space<vmem>>, vector<4x1xf32>,
    return
  }
  func.func @transform_0(%arg0: i32, %arg1: i32, %arg2: i32) -> (i32, i32, i32) {
    %c0_i32 = arith.constant 0 : i32
    return %arg1, %arg0, %arg2 : i32, i32, i32
  }
  func.func @transform_1(%arg0: i32, %arg1: i32, %arg2: i32) -> (i32, i32) {
    %c0_i32 = arith.constant 0 : i32
    %c0_i32_0 = arith.constant 0 : i32
    return %arg0, %c0_i32 : i32, i32
  }
  func.func @transform_2(%arg0: i32, %arg1: i32, %arg2: i32) -> (i32, i32) {
    %c0_i32 = arith.constant 0 : i32
    %c0_i32_0 = arith.constant 0 : i32
    return %arg0, %c0_i32 : i32, i32
  }
}

module attributes {stable_mosaic.version = 11 : i64} {
  func.func @_bn_apply_kernel(%arg0: i32, %arg1: i32, %arg2: i32, %arg3: memref<1x4x128xf32, #tpu.memory_space<vmem>>, %arg4: memref<4x1xf32, #tpu.memory_space<vmem>>, %arg5: memref<4x1xf32, #tpu.memory_space<vmem>>, %arg6: memref<1x4x128xf32, #tpu.memory_space<vmem>>) attributes {dimension_semantics = [#tpu.dimension_semantics<parallel>, #tpu.dimension_semantics<parallel>, #tpu.dimension_semantics<parallel>], iteration_bounds = array<i64: 1, 2, 2>, scalar_prefetch = 0 : i64, scratch_operands = 0 : i64, tpu.core_type = #tpu.core_type<tc>, window_params = [{transform_indices = @transform_0, window_bounds = array<i64: 1, 4, 128>}, {transform_indices = @transform_1, window_bounds = array<i64: 4, 1>}, {transform_indices = @transform_2, window_bounds = array<i64: 4, 1>}, {transform_indices = @transform_3, window_bounds = array<i64: 1, 4, 128>}]} {
    %c0 = arith.constant 0 : index
    %c0_0 = arith.constant 0 : index
    %c0_1 = arith.constant 0 : index
    %0 = vector.load %arg3[%c0, %c0_0, %c0_1] : memref<1x4x128xf32, #tpu.memory_space<vmem>>, vector<1x4x128xf32>
    %1 = vector.shape_cast %0 : vector<1x4x128xf32> to vector<4x128xf32>
    %c0_2 = arith.constant 0 : index
    %c0_3 = arith.constant 0 : index
    %2 = vector.load %arg4[%c0_2, %c0_3] : memref<4x1xf32, #tpu.memory_space<vmem>>, vector<4x1xf32>
    %3 = vector.broadcast %2 : vector<4x1xf32> to vector<4x128xf32>
    %4 = arith.mulf %1, %3 : vector<4x128xf32>
    %c0_4 = arith.constant 0 : index
    %c0_5 = arith.constant 0 : index
    %5 = vector.load %arg5[%c0_4, %c0_5] : memref<4x1xf32, #tpu.memory_space<vmem>>, vector<4x1xf32>
    %6 = vector.broadcast %5 : vector<4x1xf32> to vector<4x128xf32>
    %7 = arith.subf %4, %6 : vector<4x128xf32>
    %c0_6 = arith.constant 0 : index
    %c0_7 = arith.constant 0 : index
    %c0_8 = arith.constant 0 : index
    %8 = vector.load %arg6[%c0_6, %c0_7, %c0_8] : memref<1x4x128xf32, #tpu.memory_space<vmem>>, vector<1x4x128xf32>
    %9 = vector.shape_cast %8 : vector<1x4x128xf32> to vector<4x128xf32>
    %10 = vector.shape_cast %7 : vector<4x128xf32> to vector<1x4x128xf32>
    tpu.vector_store %arg6[%c0_6, %c0_7, %c0_8], %10 {strides = array<i32>} : memref<1x4x128xf32, #tpu.memory_space<vmem>>, vector<1x4x128xf32>,
    return
  }
  func.func @transform_0(%arg0: i32, %arg1: i32, %arg2: i32) -> (i32, i32, i32) {
    %c0_i32 = arith.constant 0 : i32
    return %arg1, %arg0, %arg2 : i32, i32, i32
  }
  func.func @transform_1(%arg0: i32, %arg1: i32, %arg2: i32) -> (i32, i32) {
    %c0_i32 = arith.constant 0 : i32
    %c0_i32_0 = arith.constant 0 : i32
    return %arg0, %c0_i32 : i32, i32
  }
  func.func @transform_2(%arg0: i32, %arg1: i32, %arg2: i32) -> (i32, i32) {
    %c0_i32 = arith.constant 0 : i32
    %c0_i32_0 = arith.constant 0 : i32
    return %arg0, %c0_i32 : i32, i32
  }
  func.func @transform_3(%arg0: i32, %arg1: i32, %arg2: i32) -> (i32, i32, i32) {
    %c0_i32 = arith.constant 0 : i32
    return %arg1, %arg0, %arg2 : i32, i32, i32
  }
}

</mosaic_0001>

<llo_original>
// kernel: batch_norm_2d.2
$region0: #{batch_norm_2d.2}
  #allocation0 [shape = 'u32[]', space=smem, size = 0x4, offset = 0x4, fixed_abs, tag = 'smem constant byte address 0x4 - core index']
  #allocation1 [shape = 'u32[144,128]{1,0:T(1,128)}', space=vmem, size = 0x12000, scoped, tag = 'internal scratch']
  %s0 = inlined_call_operand.vmem [shape: f32[2,4,256], index: 0, kind: input, shape index: {}]
  %s1 = inlined_call_operand.vmem [shape: f32[4,1], index: 1, kind: output, shape index: {0}]
  %s2 = inlined_call_operand.vmem [shape: f32[4,1], index: 2, kind: output, shape index: {1}]
  %3 = xla_tuple %s1, %s2
  %s4 = sld [smem:[#allocation0]]
  $region49: #{batch_norm_2d.2} parent=0
    _
  %s6 = ssub.s32 1, %s4
  %s7 = scalar_select 0, %s6, %s4
  loop: start=0, step=1, limit=6
  $region2: #{batch_norm_2d.2} parent=0 // loop_pre_header
    _
  $region3: #{batch_norm_2d.2} parent=0 // loop_header
    %s9 = sphi 0, %s13
    %p10 = scmp.ge.s32.totalorder %s9, 6
    %s16 = sphi 0, %s35
    %s17 = sphi 0, %s31
    %s18 = sphi 0, %s27
    %s19 = sphi 0, %s16
    %s20 = sphi 0, %s17
    %s21 = sphi 0, %s18
    %s22 = sphi 0, %s19
    %s23 = sphi 0, %s20
    %s24 = sphi 0, %s21
    %s42 = sphi 0, %s44
    %s45 = sphi 0, %s42
    %s46 = sphi 0, %s45
    %s62 = sphi 0, %s46
    %s68 = sphi 0, %s70
    %s71 = sphi 0, %s68
    %s72 = sphi 0, %s71
    %s88 = sphi 0, %s72
    %s94 = sphi 0, %s96
    %s97 = sphi 0, %s94
    %s98 = sphi 0, %s97
    %s114 = sphi 0, %s98
  $region4: #{batch_norm_2d.2} parent=0 // loop_header_branch
    %12 = sbr.rel (%p10) target = $region8
  $region5: #{batch_norm_2d.2} parent=0 // loop_body
    %s14 = ssub.s32 %s9, 1
    %s15 = ssub.s32 %s9, 2
    %s25 = sadd.s32 1, %s18
    %p26 = scmp.ge.s32.totalorder %s25, 2
    %s27 = scalar_select %p26, 0, %s25
    %s28 = sadd.s32 1, %s17
    %s29 = scalar_select %p26, %s28, %s17
    %p30 = scmp.ge.s32.totalorder %s29, 2
    %s31 = scalar_select %p30, 0, %s29
    %s32 = sadd.s32 1, %s16
    %s33 = scalar_select %p30, %s32, %s16
    %p34 = scmp.ge.s32.totalorder %s33, 1
    %s35 = scalar_select %p34, 0, %s33
    %s36 = ssub.s32 %s17, %s31
    %s37 = ssub.s32 %s16, %s35
    %s38 = sor.u32 %s36, %s37
    %s39 = ssub.s32 %s18, %s27
    %s40 = sor.u32 %s38, %s39
    %p41 = scmp.eq.s32.totalorder %s40, 0
    %s43 = sadd.s32 %s42, 1
    %s44 = scalar_select %p41, %s42, %s43
    %p47 = pneg %p41
    %p48 = scmp.eq.s32.totalorder %s9, 3
    %p49 = por %p47, %p48
    %p50 = scmp.ne.s32.totalorder %s42, %s45
    %p51 = scmp.eq.s32.totalorder %s9, 0
    %p52 = por %p50, %p51
    %p53 = scmp.ne.s32.totalorder %s42, %s45
    %p54 = scmp.eq.s32.totalorder %s14, 3
    %p55 = por %p53, %p54
    %p56 = scmp.ne.s32.totalorder %s45, %s46
    %p57 = scmp.eq.s32.totalorder %s14, 0
    %p58 = por %p56, %p57
    %p59 = scmp.ne.s32.totalorder %s45, %s46
    %p60 = scmp.eq.s32.totalorder %s15, 3
    %p61 = por %p59, %p60
    %p63 = scmp.ne.s32.totalorder %s46, %s62
    %p64 = scmp.eq.s32.totalorder %s15, 0
    %p65 = por %p63, %p64
    %s66 = ssub.s32 %s16, %s35
    %p67 = scmp.eq.s32.totalorder %s66, 0
    %s69 = sadd.s32 %s68, 1
    %s70 = scalar_select %p67, %s68, %s69
    %p73 = pneg %p67
    %p74 = scmp.eq.s32.totalorder %s9, 3
    %p75 = por %p73, %p74
    %p76 = scmp.ne.s32.totalorder %s68, %s71
    %p77 = scmp.eq.s32.totalorder %s9, 0
    %p78 = por %p76, %p77
    %p79 = scmp.ne.s32.totalorder %s68, %s71
    %p80 = scmp.eq.s32.totalorder %s14, 3
    %p81 = por %p79, %p80
    %p82 = scmp.ne.s32.totalorder %s71, %s72
    %p83 = scmp.eq.s32.totalorder %s14, 0
    %p84 = por %p82, %p83
    %p85 = scmp.ne.s32.totalorder %s71, %s72
    %p86 = scmp.eq.s32.totalorder %s15, 3
    %p87 = por %p85, %p86
    %p89 = scmp.ne.s32.totalorder %s72, %s88
    %p90 = scmp.eq.s32.totalorder %s15, 0
    %p91 = por %p89, %p90
    %s92 = ssub.s32 %s16, %s35
    %p93 = scmp.eq.s32.totalorder %s92, 0
    %s95 = sadd.s32 %s94, 1
    %s96 = scalar_select %p93, %s94, %s95
    %p99 = pneg %p93
    %p100 = scmp.eq.s32.totalorder %s9, 3
    %p101 = por %p99, %p100
    %p102 = scmp.ne.s32.totalorder %s94, %s97
    %p103 = scmp.eq.s32.totalorder %s9, 0
    %p104 = por %p102, %p103
    %p105 = scmp.ne.s32.totalorder %s94, %s97
    %p106 = scmp.eq.s32.totalorder %s14, 3
    %p107 = por %p105, %p106
    %p108 = scmp.ne.s32.totalorder %s97, %s98
    %p109 = scmp.eq.s32.totalorder %s14, 0
    %p110 = por %p108, %p109
    %p111 = scmp.ne.s32.totalorder %s97, %s98
    %p112 = scmp.eq.s32.totalorder %s15, 3
    %p113 = por %p111, %p112
    %p115 = scmp.ne.s32.totalorder %s98, %s114
    %p116 = scmp.eq.s32.totalorder %s15, 0
    %p117 = por %p115, %p116
    %p118 = scmp.le.s32.totalorder 1, %s9
    %p119 = scmp.lt.s32.totalorder %s9, 5
    %p120 = pnand %p118, %p119
    %p121 = pneg %p120
    // Predicated region
    $region9: #{batch_norm_2d.2} parent=5 // pred_check
      _
    $region10: #{batch_norm_2d.2} parent=5 // pred_check_branch
      %123 = sbr.rel (%p120) target = $region12
    $region11: #{batch_norm_2d.2} parent=5 // pred_region
      %s124 = ssub.s32 %s9, 1
    $region12: #{batch_norm_2d.2} parent=5 // pred_fallthru
      _
    %p125 = scmp.lt.s32.totalorder %s9, 4
    // Predicated region
    $region13: #{batch_norm_2d.2} parent=5 // pred_check
      %p126 = pneg %p125
    $region14: #{batch_norm_2d.2} parent=5 // pred_check_branch
      %128 = sbr.rel (%p126) target = $region16
    $region15: #{batch_norm_2d.2} parent=5 // pred_region
      // Predicated region
      $region17: #{batch_norm_2d.2} parent=15 // pred_check
        %p129 = pneg %p52
      $region18: #{batch_norm_2d.2} parent=15 // pred_check_branch
        %131 = sbr.rel (%p129) target = $region20
      $region19: #{batch_norm_2d.2} parent=15 // pred_region
        %p132 = scmp.lt.s32.totalorder %s17, 1
        %s133 = scalar_select %p132, %s17, 1
        %p134 = scmp.lt.s32.totalorder %s16, 0
        %s135 = scalar_select %p134, %s16, 0
        %p136 = scmp.lt.s32.totalorder %s18, 1
        %s137 = scalar_select %p136, %s18, 1
        %s138 = smul.addr %s135, 2
        %s139 = sadd.s32 %s137, %s138
        %s140 = smul.addr %s133, 2
        %s141 = sadd.s32 %s139, %s140
        %s142 = smul.addr %s141, 4
        %s143 = scalar_lea.vmem %s0, %s142
      $region20: #{batch_norm_2d.2} parent=15 // pred_fallthru
        _
    $region16: #{batch_norm_2d.2} parent=5 // pred_fallthru
      _
    %p144 = scmp.le.s32.totalorder 1, %s9
    %p145 = scmp.lt.s32.totalorder %s9, 5
    %p146 = pnand %p144, %p145
    %p147 = pneg %p146
    // Predicated region
    $region21: #{batch_norm_2d.2} parent=5 // pred_check
      _
    $region22: #{batch_norm_2d.2} parent=5 // pred_check_branch
      %149 = sbr.rel (%p146) target = $region24
    $region23: #{batch_norm_2d.2} parent=5 // pred_region
      %s150 = ssub.s32 %s9, 1
      %p151 = scmp.lt.s32.totalorder %s20, 1
      %s152 = scalar_select %p151, %s20, 1
      %p153 = scmp.lt.s32.totalorder %s19, 0
      %s154 = scalar_select %p153, %s19, 0
      %p155 = scmp.lt.s32.totalorder %s21, 1
      %s156 = scalar_select %p155, %s21, 1
      %s157 = smul.addr %s154, 2
      %s158 = sadd.s32 %s156, %s157
      %s159 = smul.addr %s152, 2
      %s160 = sadd.s32 %s158, %s159
      %s161 = smul.addr %s160, 4
      %s162 = scalar_lea.vmem %s0, %s161
      %p163 = pneg %p58
      %p164 = pneg %p55
      %p165 = pneg %p84
      %p166 = pneg %p81
      %p167 = scmp.lt.s32.totalorder %s19, 0
      %s168 = scalar_select %p167, %s19, 0
      %s169 = smul.addr %s168, 4
      %s170 = scalar_lea.vmem %s1, %s169
      %p171 = pneg %p110
      %p172 = pneg %p107
      %p173 = scmp.lt.s32.totalorder %s19, 0
      %s174 = scalar_select %p173, %s19, 0
      %s175 = smul.addr %s174, 4
      %s176 = scalar_lea.vmem %s2, %s175
      %p177 = scmp.lt.s32.totalorder %s20, 1
      %s178 = scalar_select %p177, %s20, 1
      %p179 = scmp.lt.s32.totalorder %s19, 0
      %s180 = scalar_select %p179, %s19, 0
      %p181 = scmp.lt.s32.totalorder %s21, 1
      %s182 = scalar_select %p181, %s21, 1
      %s183 = smul.addr %s180, 2
      %s184 = sadd.s32 %s182, %s183
      %s185 = smul.addr %s178, 2
      %s186 = sadd.s32 %s184, %s185
      %s187 = smul.addr %s186, 4
      %s188 = scalar_lea.vmem %s0, %s187
      %p189 = scmp.lt.s32.totalorder %s19, 0
      %s190 = scalar_select %p189, %s19, 0
      %s191 = smul.addr %s190, 4
      %s192 = scalar_lea.vmem %s1, %s191
      %p193 = scmp.lt.s32.totalorder %s19, 0
      %s194 = scalar_select %p193, %s19, 0
      %s195 = smul.addr %s194, 4
      %s196 = scalar_lea.vmem %s2, %s195
      %p197 = scmp.eq.s32.totalorder %s20, 0
      %p198 = scmp.eq.s32.totalorder %s21, 0
      %p199 = pnand %p197, %p198
      %p200 = pneg %p199
      // Predicated region
      $region25: #{batch_norm_2d.2} parent=23 // pred_check
        _
      $region26: #{batch_norm_2d.2} parent=23 // pred_check_branch
        %202 = sbr.rel (%p199) target = $region28
      $region27: #{batch_norm_2d.2} parent=23 // pred_region
        %vm203 = vcmask 3072
        %204 = vst.msk [vmem:[%s192] sm:$0xf] %vm203, 0.0
        %205 = vst.msk [vmem:[%s196] sm:$0xf] %vm203, 0.0
      $region28: #{batch_norm_2d.2} parent=23 // pred_fallthru
        _
      %v206 = vld [vmem:[%s188] sm:$0xf]
      %v207 = vld [vmem:[%s192] sm:$0xf]
      %vm208 = vcmask 1043456
      %v209 = vsel %vm208, %v206, 0.0
      %210 = vadd.xlane.f32.xlu0 %v209
      %v211 = vpop.xlane.xlu0 %210
      %v212 = vadd.f32 %v207, %v211
      %vm213 = vcmask 3072
      %214 = vst.msk [vmem:[%s192] sm:$0xf] %vm213, %v212
      %v215 = vld [vmem:[%s196] sm:$0xf]
      %v216 = vmul.f32 %v206, %v206
      %v217 = vsel %vm208, %v216, 0.0
      %218 = vadd.xlane.f32.xlu0 %v217
      %v219 = vpop.xlane.xlu0 %218
      %v220 = vadd.f32 %v215, %v219
      %221 = vst.msk [vmem:[%s196] sm:$0xf] %vm213, %v220
      %p222 = scmp.lt.s32.totalorder %s19, 0
      %s223 = scalar_select %p222, %s19, 0
      %s224 = smul.addr %s223, 4
      %s225 = scalar_lea.vmem %s1, %s224
      %p226 = scmp.lt.s32.totalorder %s19, 0
      %s227 = scalar_select %p226, %s19, 0
      %s228 = smul.addr %s227, 4
      %s229 = scalar_lea.vmem %s2, %s228
      // Predicated region
      $region29: #{batch_norm_2d.2} parent=23 // pred_check
        %p230 = pneg %p81
      $region30: #{batch_norm_2d.2} parent=23 // pred_check_branch
        %232 = sbr.rel (%p230) target = $region32
      $region31: #{batch_norm_2d.2} parent=23 // pred_region
        _
      $region32: #{batch_norm_2d.2} parent=23 // pred_fallthru
        _
      // Predicated region
      $region33: #{batch_norm_2d.2} parent=23 // pred_check
        %p233 = pneg %p107
      $region34: #{batch_norm_2d.2} parent=23 // pred_check_branch
        %235 = sbr.rel (%p233) target = $region36
      $region35: #{batch_norm_2d.2} parent=23 // pred_region
        _
      $region36: #{batch_norm_2d.2} parent=23 // pred_fallthru
        _
      // Predicated region
      $region37: #{batch_norm_2d.2} parent=23 // pred_check
        %p236 = pneg %p81
      $region38: #{batch_norm_2d.2} parent=23 // pred_check_branch
        %238 = sbr.rel (%p236) target = $region40
      $region39: #{batch_norm_2d.2} parent=23 // pred_region
        %p239 = scmp.lt.s32.totalorder %s19, 0
        %s240 = scalar_select %p239, %s19, 0
        %s241 = smul.addr %s240, 4
        %s242 = scalar_lea.vmem %s1, %s241
      $region40: #{batch_norm_2d.2} parent=23 // pred_fallthru
        _
      // Predicated region
      $region41: #{batch_norm_2d.2} parent=23 // pred_check
        %p243 = pneg %p107
      $region42: #{batch_norm_2d.2} parent=23 // pred_check_branch
        %245 = sbr.rel (%p243) target = $region44
      $region43: #{batch_norm_2d.2} parent=23 // pred_region
        %p246 = scmp.lt.s32.totalorder %s19, 0
        %s247 = scalar_select %p246, %s19, 0
        %s248 = smul.addr %s247, 4
        %s249 = scalar_lea.vmem %s2, %s248
      $region44: #{batch_norm_2d.2} parent=23 // pred_fallthru
        _
    $region24: #{batch_norm_2d.2} parent=5 // pred_fallthru
      _
    %p250 = scmp.le.s32.totalorder 2, %s9
    // Predicated region
    $region45: #{batch_norm_2d.2} parent=5 // pred_check
      %p251 = pneg %p250
    $region46: #{batch_norm_2d.2} parent=5 // pred_check_branch
      %253 = sbr.rel (%p251) target = $region48
    $region47: #{batch_norm_2d.2} parent=5 // pred_region
      %s254 = ssub.s32 %s9, 2
    $region48: #{batch_norm_2d.2} parent=5 // pred_fallthru
      _
  $region6: #{batch_norm_2d.2} parent=0 // loop_footer
    %s13 = sadd.s32 1, %s9
  $region7: #{batch_norm_2d.2} parent=0 // loop_footer_branch
    %8 = sbr.rel target = $region3
  $region8: #{batch_norm_2d.2} parent=0 // loop_exit
    _

// kernel: batch_norm_2d.3
$region0: #{batch_norm_2d.3}
  #allocation0 [shape = 'u32[]', space=smem, size = 0x4, offset = 0x4, fixed_abs, tag = 'smem constant byte address 0x4 - core index']
  #allocation1 [shape = 'u32[144,128]{1,0:T(1,128)}', space=vmem, size = 0x12000, scoped, tag = 'internal scratch']
  %s0 = inlined_call_operand.vmem [shape: f32[2,4,256], index: 0, kind: input, shape index: {}]
  %s1 = inlined_call_operand.vmem [shape: f32[4,1], index: 1, kind: input, shape index: {}]
  %s2 = inlined_call_operand.vmem [shape: f32[4,1], index: 2, kind: input, shape index: {}]
  %s3 = inlined_call_operand.vmem [shape: f32[2,4,256], index: 3, kind: output, shape index: {}]
  %s4 = sld [smem:[#allocation0]]
  $region45: #{batch_norm_2d.3} parent=0
    _
  %s6 = ssub.s32 1, %s4
  %s7 = scalar_select 0, %s6, %s4
  loop: start=0, step=1, limit=6
  $region2: #{batch_norm_2d.3} parent=0 // loop_pre_header
    _
  $region3: #{batch_norm_2d.3} parent=0 // loop_header
    %s9 = sphi 0, %s13
    %p10 = scmp.ge.s32.totalorder %s9, 6
    %s16 = sphi 0, %s35
    %s17 = sphi 0, %s31
    %s18 = sphi 0, %s27
    %s19 = sphi 0, %s16
    %s20 = sphi 0, %s17
    %s21 = sphi 0, %s18
    %s22 = sphi 0, %s19
    %s23 = sphi 0, %s20
    %s24 = sphi 0, %s21
    %s42 = sphi 0, %s44
    %s45 = sphi 0, %s42
    %s46 = sphi 0, %s45
    %s62 = sphi 0, %s46
    %s68 = sphi 0, %s70
    %s71 = sphi 0, %s68
    %s72 = sphi 0, %s71
    %s88 = sphi 0, %s72
    %s94 = sphi 0, %s96
    %s97 = sphi 0, %s94
    %s98 = sphi 0, %s97
    %s114 = sphi 0, %s98
    %s124 = sphi 0, %s126
    %s127 = sphi 0, %s124
    %s128 = sphi 0, %s127
    %s144 = sphi 0, %s128
  $region4: #{batch_norm_2d.3} parent=0 // loop_header_branch
    %12 = sbr.rel (%p10) target = $region8
  $region5: #{batch_norm_2d.3} parent=0 // loop_body
    %s14 = ssub.s32 %s9, 1
    %s15 = ssub.s32 %s9, 2
    %s25 = sadd.s32 1, %s18
    %p26 = scmp.ge.s32.totalorder %s25, 2
    %s27 = scalar_select %p26, 0, %s25
    %s28 = sadd.s32 1, %s17
    %s29 = scalar_select %p26, %s28, %s17
    %p30 = scmp.ge.s32.totalorder %s29, 2
    %s31 = scalar_select %p30, 0, %s29
    %s32 = sadd.s32 1, %s16
    %s33 = scalar_select %p30, %s32, %s16
    %p34 = scmp.ge.s32.totalorder %s33, 1
    %s35 = scalar_select %p34, 0, %s33
    %s36 = ssub.s32 %s17, %s31
    %s37 = ssub.s32 %s16, %s35
    %s38 = sor.u32 %s36, %s37
    %s39 = ssub.s32 %s18, %s27
    %s40 = sor.u32 %s38, %s39
    %p41 = scmp.eq.s32.totalorder %s40, 0
    %s43 = sadd.s32 %s42, 1
    %s44 = scalar_select %p41, %s42, %s43
    %p47 = pneg %p41
    %p48 = scmp.eq.s32.totalorder %s9, 3
    %p49 = por %p47, %p48
    %p50 = scmp.ne.s32.totalorder %s42, %s45
    %p51 = scmp.eq.s32.totalorder %s9, 0
    %p52 = por %p50, %p51
    %p53 = scmp.ne.s32.totalorder %s42, %s45
    %p54 = scmp.eq.s32.totalorder %s14, 3
    %p55 = por %p53, %p54
    %p56 = scmp.ne.s32.totalorder %s45, %s46
    %p57 = scmp.eq.s32.totalorder %s14, 0
    %p58 = por %p56, %p57
    %p59 = scmp.ne.s32.totalorder %s45, %s46
    %p60 = scmp.eq.s32.totalorder %s15, 3
    %p61 = por %p59, %p60
    %p63 = scmp.ne.s32.totalorder %s46, %s62
    %p64 = scmp.eq.s32.totalorder %s15, 0
    %p65 = por %p63, %p64
    %s66 = ssub.s32 %s16, %s35
    %p67 = scmp.eq.s32.totalorder %s66, 0
    %s69 = sadd.s32 %s68, 1
    %s70 = scalar_select %p67, %s68, %s69
    %p73 = pneg %p67
    %p74 = scmp.eq.s32.totalorder %s9, 3
    %p75 = por %p73, %p74
    %p76 = scmp.ne.s32.totalorder %s68, %s71
    %p77 = scmp.eq.s32.totalorder %s9, 0
    %p78 = por %p76, %p77
    %p79 = scmp.ne.s32.totalorder %s68, %s71
    %p80 = scmp.eq.s32.totalorder %s14, 3
    %p81 = por %p79, %p80
    %p82 = scmp.ne.s32.totalorder %s71, %s72
    %p83 = scmp.eq.s32.totalorder %s14, 0
    %p84 = por %p82, %p83
    %p85 = scmp.ne.s32.totalorder %s71, %s72
    %p86 = scmp.eq.s32.totalorder %s15, 3
    %p87 = por %p85, %p86
    %p89 = scmp.ne.s32.totalorder %s72, %s88
    %p90 = scmp.eq.s32.totalorder %s15, 0
    %p91 = por %p89, %p90
    %s92 = ssub.s32 %s16, %s35
    %p93 = scmp.eq.s32.totalorder %s92, 0
    %s95 = sadd.s32 %s94, 1
    %s96 = scalar_select %p93, %s94, %s95
    %p99 = pneg %p93
    %p100 = scmp.eq.s32.totalorder %s9, 3
    %p101 = por %p99, %p100
    %p102 = scmp.ne.s32.totalorder %s94, %s97
    %p103 = scmp.eq.s32.totalorder %s9, 0
    %p104 = por %p102, %p103
    %p105 = scmp.ne.s32.totalorder %s94, %s97
    %p106 = scmp.eq.s32.totalorder %s14, 3
    %p107 = por %p105, %p106
    %p108 = scmp.ne.s32.totalorder %s97, %s98
    %p109 = scmp.eq.s32.totalorder %s14, 0
    %p110 = por %p108, %p109
    %p111 = scmp.ne.s32.totalorder %s97, %s98
    %p112 = scmp.eq.s32.totalorder %s15, 3
    %p113 = por %p111, %p112
    %p115 = scmp.ne.s32.totalorder %s98, %s114
    %p116 = scmp.eq.s32.totalorder %s15, 0
    %p117 = por %p115, %p116
    %s118 = ssub.s32 %s17, %s31
    %s119 = ssub.s32 %s16, %s35
    %s120 = sor.u32 %s118, %s119
    %s121 = ssub.s32 %s18, %s27
    %s122 = sor.u32 %s120, %s121
    %p123 = scmp.eq.s32.totalorder %s122, 0
    %s125 = sadd.s32 %s124, 1
    %s126 = scalar_select %p123, %s124, %s125
    %p129 = pneg %p123
    %p130 = scmp.eq.s32.totalorder %s9, 3
    %p131 = por %p129, %p130
    %p132 = scmp.ne.s32.totalorder %s124, %s127
    %p133 = scmp.eq.s32.totalorder %s9, 0
    %p134 = por %p132, %p133
    %p135 = scmp.ne.s32.totalorder %s124, %s127
    %p136 = scmp.eq.s32.totalorder %s14, 3
    %p137 = por %p135, %p136
    %p138 = scmp.ne.s32.totalorder %s127, %s128
    %p139 = scmp.eq.s32.totalorder %s14, 0
    %p140 = por %p138, %p139
    %p141 = scmp.ne.s32.totalorder %s127, %s128
    %p142 = scmp.eq.s32.totalorder %s15, 3
    %p143 = por %p141, %p142
    %p145 = scmp.ne.s32.totalorder %s128, %s144
    %p146 = scmp.eq.s32.totalorder %s15, 0
    %p147 = por %p145, %p146
    %p148 = scmp.le.s32.totalorder 1, %s9
    %p149 = scmp.lt.s32.totalorder %s9, 5
    %p150 = pnand %p148, %p149
    %p151 = pneg %p150
    // Predicated region
    $region9: #{batch_norm_2d.3} parent=5 // pred_check
      _
    $region10: #{batch_norm_2d.3} parent=5 // pred_check_branch
      %153 = sbr.rel (%p150) target = $region12
    $region11: #{batch_norm_2d.3} parent=5 // pred_region
      %s154 = ssub.s32 %s9, 1
      // Predicated region
      $region13: #{batch_norm_2d.3} parent=11 // pred_check
        %p155 = pneg %p84
      $region14: #{batch_norm_2d.3} parent=11 // pred_check_branch
        %157 = sbr.rel (%p155) target = $region16
      $region15: #{batch_norm_2d.3} parent=11 // pred_region
        %p158 = scmp.lt.s32.totalorder %s19, 0
        %s159 = scalar_select %p158, %s19, 0
        %s160 = smul.addr %s159, 4
        %s161 = scalar_lea.vmem %s1, %s160
      $region16: #{batch_norm_2d.3} parent=11 // pred_fallthru
        _
      // Predicated region
      $region17: #{batch_norm_2d.3} parent=11 // pred_check
        %p162 = pneg %p110
      $region18: #{batch_norm_2d.3} parent=11 // pred_check_branch
        %164 = sbr.rel (%p162) target = $region20
      $region19: #{batch_norm_2d.3} parent=11 // pred_region
        %p165 = scmp.lt.s32.totalorder %s19, 0
        %s166 = scalar_select %p165, %s19, 0
        %s167 = smul.addr %s166, 4
        %s168 = scalar_lea.vmem %s2, %s167
      $region20: #{batch_norm_2d.3} parent=11 // pred_fallthru
        _
    $region12: #{batch_norm_2d.3} parent=5 // pred_fallthru
      _
    %p169 = scmp.lt.s32.totalorder %s9, 4
    // Predicated region
    $region21: #{batch_norm_2d.3} parent=5 // pred_check
      %p170 = pneg %p169
    $region22: #{batch_norm_2d.3} parent=5 // pred_check_branch
      %172 = sbr.rel (%p170) target = $region24
    $region23: #{batch_norm_2d.3} parent=5 // pred_region
      // Predicated region
      $region25: #{batch_norm_2d.3} parent=23 // pred_check
        %p173 = pneg %p52
      $region26: #{batch_norm_2d.3} parent=23 // pred_check_branch
        %175 = sbr.rel (%p173) target = $region28
      $region27: #{batch_norm_2d.3} parent=23 // pred_region
        %p176 = scmp.lt.s32.totalorder %s17, 1
        %s177 = scalar_select %p176, %s17, 1
        %p178 = scmp.lt.s32.totalorder %s16, 0
        %s179 = scalar_select %p178, %s16, 0
        %p180 = scmp.lt.s32.totalorder %s18, 1
        %s181 = scalar_select %p180, %s18, 1
        %s182 = smul.addr %s179, 2
        %s183 = sadd.s32 %s181, %s182
        %s184 = smul.addr %s177, 2
        %s185 = sadd.s32 %s183, %s184
        %s186 = smul.addr %s185, 4
        %s187 = scalar_lea.vmem %s0, %s186
      $region28: #{batch_norm_2d.3} parent=23 // pred_fallthru
        _
    $region24: #{batch_norm_2d.3} parent=5 // pred_fallthru
      _
    %p188 = scmp.le.s32.totalorder 1, %s9
    %p189 = scmp.lt.s32.totalorder %s9, 5
    %p190 = pnand %p188, %p189
    %p191 = pneg %p190
    // Predicated region
    $region29: #{batch_norm_2d.3} parent=5 // pred_check
      _
    $region30: #{batch_norm_2d.3} parent=5 // pred_check_branch
      %193 = sbr.rel (%p190) target = $region32
    $region31: #{batch_norm_2d.3} parent=5 // pred_region
      %s194 = ssub.s32 %s9, 1
      %p195 = scmp.lt.s32.totalorder %s20, 1
      %s196 = scalar_select %p195, %s20, 1
      %p197 = scmp.lt.s32.totalorder %s19, 0
      %s198 = scalar_select %p197, %s19, 0
      %p199 = scmp.lt.s32.totalorder %s21, 1
      %s200 = scalar_select %p199, %s21, 1
      %s201 = smul.addr %s198, 2
      %s202 = sadd.s32 %s200, %s201
      %s203 = smul.addr %s196, 2
      %s204 = sadd.s32 %s202, %s203
      %s205 = smul.addr %s204, 4
      %s206 = scalar_lea.vmem %s0, %s205
      %p207 = pneg %p58
      %p208 = pneg %p55
      %p209 = scmp.lt.s32.totalorder %s19, 0
      %s210 = scalar_select %p209, %s19, 0
      %s211 = smul.addr %s210, 4
      %s212 = scalar_lea.vmem %s1, %s211
      %p213 = pneg %p84
      %p214 = pneg %p81
      %p215 = scmp.lt.s32.totalorder %s19, 0
      %s216 = scalar_select %p215, %s19, 0
      %s217 = smul.addr %s216, 4
      %s218 = scalar_lea.vmem %s2, %s217
      %p219 = pneg %p110
      %p220 = pneg %p107
      %p221 = pneg %p140
      %p222 = pneg %p137
      %p223 = scmp.lt.s32.totalorder %s20, 1
      %s224 = scalar_select %p223, %s20, 1
      %p225 = scmp.lt.s32.totalorder %s19, 0
      %s226 = scalar_select %p225, %s19, 0
      %p227 = scmp.lt.s32.totalorder %s21, 1
      %s228 = scalar_select %p227, %s21, 1
      %s229 = smul.addr %s226, 2
      %s230 = sadd.s32 %s228, %s229
      %s231 = smul.addr %s224, 2
      %s232 = sadd.s32 %s230, %s231
      %s233 = smul.addr %s232, 4
      %s234 = scalar_lea.vmem %s3, %s233
      %p235 = scmp.lt.s32.totalorder %s20, 1
      %s236 = scalar_select %p235, %s20, 1
      %p237 = scmp.lt.s32.totalorder %s19, 0
      %s238 = scalar_select %p237, %s19, 0
      %p239 = scmp.lt.s32.totalorder %s21, 1
      %s240 = scalar_select %p239, %s21, 1
      %s241 = smul.addr %s238, 2
      %s242 = sadd.s32 %s240, %s241
      %s243 = smul.addr %s236, 2
      %s244 = sadd.s32 %s242, %s243
      %s245 = smul.addr %s244, 4
      %s246 = scalar_lea.vmem %s0, %s245
      %p247 = scmp.lt.s32.totalorder %s19, 0
      %s248 = scalar_select %p247, %s19, 0
      %s249 = smul.addr %s248, 4
      %s250 = scalar_lea.vmem %s1, %s249
      %p251 = scmp.lt.s32.totalorder %s19, 0
      %s252 = scalar_select %p251, %s19, 0
      %s253 = smul.addr %s252, 4
      %s254 = scalar_lea.vmem %s2, %s253
      %p255 = scmp.lt.s32.totalorder %s20, 1
      %s256 = scalar_select %p255, %s20, 1
      %p257 = scmp.lt.s32.totalorder %s19, 0
      %s258 = scalar_select %p257, %s19, 0
      %p259 = scmp.lt.s32.totalorder %s21, 1
      %s260 = scalar_select %p259, %s21, 1
      %s261 = smul.addr %s258, 2
      %s262 = sadd.s32 %s260, %s261
      %s263 = smul.addr %s256, 2
      %s264 = sadd.s32 %s262, %s263
      %s265 = smul.addr %s264, 4
      %s266 = scalar_lea.vmem %s3, %s265
      %v267 = vld [vmem:[%s246] sm:$0xf]
      %v268 = vld [vmem:[%s250] sm:$0xf]
      %270 = vset.pattern.permute.xlu0 0
      %271 = vperm.xlu0 %270, %v268
      %v272 = vpop.permute.xlu0 %271
      %v274 = vmul.f32 %v267, %v272
      %v275 = vld [vmem:[%s254] sm:$0xf]
      %277 = vset.pattern.permute.xlu0 0
      %278 = vperm.xlu0 %277, %v275
      %v279 = vpop.permute.xlu0 %278
      %v281 = vsub.f32 %v274, %v279
      %282 = vst [vmem:[%s266] sm:$0xf] %v281
      %p283 = scmp.lt.s32.totalorder %s20, 1
      %s284 = scalar_select %p283, %s20, 1
      %p285 = scmp.lt.s32.totalorder %s19, 0
      %s286 = scalar_select %p285, %s19, 0
      %p287 = scmp.lt.s32.totalorder %s21, 1
      %s288 = scalar_select %p287, %s21, 1
      %s289 = smul.addr %s286, 2
      %s290 = sadd.s32 %s288, %s289
      %s291 = smul.addr %s284, 2
      %s292 = sadd.s32 %s290, %s291
      %s293 = smul.addr %s292, 4
      %s294 = scalar_lea.vmem %s3, %s293
      // Predicated region
      $region33: #{batch_norm_2d.3} parent=31 // pred_check
        %p295 = pneg %p137
      $region34: #{batch_norm_2d.3} parent=31 // pred_check_branch
        %297 = sbr.rel (%p295) target = $region36
      $region35: #{batch_norm_2d.3} parent=31 // pred_region
        _
      $region36: #{batch_norm_2d.3} parent=31 // pred_fallthru
        _
    $region32: #{batch_norm_2d.3} parent=5 // pred_fallthru
      _
    %p298 = scmp.le.s32.totalorder 2, %s9
    // Predicated region
    $region37: #{batch_norm_2d.3} parent=5 // pred_check
      %p299 = pneg %p298
    $region38: #{batch_norm_2d.3} parent=5 // pred_check_branch
      %301 = sbr.rel (%p299) target = $region40
    $region39: #{batch_norm_2d.3} parent=5 // pred_region
      %s302 = ssub.s32 %s9, 2
      // Predicated region
      $region41: #{batch_norm_2d.3} parent=39 // pred_check
        %p303 = pneg %p143
      $region42: #{batch_norm_2d.3} parent=39 // pred_check_branch
        %305 = sbr.rel (%p303) target = $region44
      $region43: #{batch_norm_2d.3} parent=39 // pred_region
        %p306 = scmp.lt.s32.totalorder %s23, 1
        %s307 = scalar_select %p306, %s23, 1
        %p308 = scmp.lt.s32.totalorder %s22, 0
        %s309 = scalar_select %p308, %s22, 0
        %p310 = scmp.lt.s32.totalorder %s24, 1
        %s311 = scalar_select %p310, %s24, 1
        %s312 = smul.addr %s309, 2
        %s313 = sadd.s32 %s311, %s312
        %s314 = smul.addr %s307, 2
        %s315 = sadd.s32 %s313, %s314
        %s316 = smul.addr %s315, 4
        %s317 = scalar_lea.vmem %s3, %s316
      $region44: #{batch_norm_2d.3} parent=39 // pred_fallthru
        _
    $region40: #{batch_norm_2d.3} parent=5 // pred_fallthru
      _
  $region6: #{batch_norm_2d.3} parent=0 // loop_footer
    %s13 = sadd.s32 1, %s9
  $region7: #{batch_norm_2d.3} parent=0 // loop_footer_branch
    %8 = sbr.rel target = $region3
  $region8: #{batch_norm_2d.3} parent=0 // loop_exit
    _

</llo_original>
